<compile_context>
chip_gen: v6e
topology: v6e:2x2x1
jax: 0.10.0
libtpu: 0.0.40
codegen_flags: <defaults>
</compile_context>

<pallas_src>
import jax
import jax.numpy as jnp
from jax.experimental import pallas as pl
from jax.experimental.pallas import tpu as pltpu


def cdefunc_kernel(z_ref, w_ref, b_ref, o_ref):
    # Hot path: matmul on MXU (f32 accumulate) + bias add + tanh (EUP), in VMEM.
    acc = jnp.dot(z_ref[...], w_ref[...], preferred_element_type=jnp.float32)
    acc = acc + b_ref[...]
    o_ref[...] = jnp.tanh(acc).astype(o_ref.dtype)


def _pick_batch_tile(batch, hidden, out_features, max_tile=4096,
                     bytes_budget=8 << 20):
    """Rows per grid step.

    Big enough to amortize per-step overhead (>=512 where the batch allows),
    small enough that the double-buffered f32 input+output tiles stay well
    under the scoped VMEM limit on every TPU generation (incl. v7x).
    """
    per_row = 2 * 4 * (hidden + out_features)  # 2x-buffered f32 in + out rows
    tb = bytes_budget // per_row
    tb = int(max(8, min(max_tile, (tb // 8) * 8)))
    padded_batch = int(pl.cdiv(batch, 8) * 8)
    if tb >= padded_batch:
        return padded_batch
    return tb


def cde_func_forward(t, z, w_t, b, input_channels, hidden_channels, *,
                     compute_dtype=jnp.float32, max_batch_tile=4096):
    """Pallas implementation of CDEFunc.forward.

    Args:
      t: unused scalar time (kept for API parity with the PyTorch module).
      z: (batch, hidden_channels) float32.
      w_t: (hidden_channels, input_channels * hidden_channels) float32
           (this is W.T where W is the PyTorch Linear weight).
      b: (input_channels * hidden_channels,) float32 bias.
      compute_dtype: dtype fed to the MXU for z and W^T (f32 or bf16). The
           accumulation, bias add and tanh are always f32.
      max_batch_tile: cap on rows per grid step.
    Returns:
      (batch, hidden_channels, input_channels) float32.
    """
    del t
    batch = z.shape[0]
    hidden = hidden_channels
    out_features = input_channels * hidden_channels
    assert z.shape == (batch, hidden)
    assert w_t.shape == (hidden, out_features)
    assert b.shape == (out_features,)

    z_in = z.astype(compute_dtype)
    w_in = w_t.astype(compute_dtype)
    b2d = b.reshape(1, out_features).astype(jnp.float32)

    tb = _pick_batch_tile(batch, hidden, out_features, max_tile=max_batch_tile)
    padded = int(pl.cdiv(batch, tb) * tb)
    if padded != batch:
        z_in = jnp.pad(z_in, ((0, padded - batch), (0, 0)))
    grid = (padded // tb,)

    out = pl.pallas_call(
        cdefunc_kernel,
        out_shape=jax.ShapeDtypeStruct((padded, out_features), jnp.float32),
        grid_spec=pl.GridSpec(
            grid=grid,
            in_specs=[
                # z tiles stream over the batch axis.
                pl.BlockSpec((tb, hidden), lambda i: (i, 0)),
                # Weights / bias: constant block index -> VMEM-resident.
                pl.BlockSpec((hidden, out_features), lambda i: (0, 0)),
                pl.BlockSpec((1, out_features), lambda i: (0, 0)),
            ],
            out_specs=pl.BlockSpec((tb, out_features), lambda i: (i, 0)),
        ),
        compiler_params=pltpu.CompilerParams(
            # Batch tiles are independent -> shard across v7x's 2 TensorCores.
            dimension_semantics=("parallel",),
        ),
    )(z_in, w_in, b2d)

    out = out[:batch]
    # .view(batch, hidden_channels, input_channels) — glue reshape in plain JAX.
    return out.reshape(batch, hidden_channels, input_channels)


if __name__ == "__main__":
    input_channels = 4
    hidden_channels = 32
    batch = 8

    key = jax.random.PRNGKey(0)
    k_z, k_w, k_b, k_z2 = jax.random.split(key, 4)

    # Deterministic parameter init (mimics nn.Linear uniform bound 1/sqrt(fan_in)).
    bound = 1.0 / jnp.sqrt(jnp.float32(hidden_channels))
    # PyTorch Linear weight is (out_features, in_features); we store its transpose.
    W = jax.random.uniform(
        k_w, (input_channels * hidden_channels, hidden_channels),
        dtype=jnp.float32, minval=-bound, maxval=bound)
    b = jax.random.uniform(
        k_b, (input_channels * hidden_channels,),
        dtype=jnp.float32, minval=-bound, maxval=bound)
    W_t = W.T  # (hidden, input*hidden)

    t = jnp.float32(0.0)  # unused, parity with forward(t, z)

    # --- Case 1: small batch, f32 path (exact semantics of the module). ---
    z = jax.random.normal(k_z, (batch, hidden_channels), dtype=jnp.float32)
    out = cde_func_forward(t, z, W_t, b, input_channels, hidden_channels)
    out = jax.block_until_ready(out)
    ref = jnp.tanh(z @ W.T + b).reshape(batch, hidden_channels, input_channels)
    assert out.shape == (batch, hidden_channels, input_channels)
    assert jnp.allclose(out, ref, atol=1e-5, rtol=1e-5)

    # --- Case 2: batch not a multiple of the tile -> exercises padding and a
    #     multi-step (pipelined, "parallel") grid with resident weights. ---
    batch2 = 40
    z2 = jax.random.normal(k_z2, (batch2, hidden_channels), dtype=jnp.float32)
    out2 = cde_func_forward(t, z2, W_t, b, input_channels, hidden_channels,
                            max_batch_tile=16)
    out2 = jax.block_until_ready(out2)
    ref2 = jnp.tanh(z2 @ W.T + b).reshape(batch2, hidden_channels, input_channels)
    assert jnp.allclose(out2, ref2, atol=1e-5, rtol=1e-5)

    # --- Case 3: bf16 MXU inputs (memory-bound speed path); looser tolerance. ---
    out_bf16 = cde_func_forward(t, z, W_t, b, input_channels, hidden_channels,
                                compute_dtype=jnp.bfloat16)
    out_bf16 = jax.block_until_ready(out_bf16)
    assert jnp.allclose(out_bf16, ref, atol=2e-2, rtol=2e-2)

    print("KERNEL_OK")
</pallas_src>

<mosaic_0001>
module attributes {stable_mosaic.version = 11 : i64} {
  func.func @cdefunc_kernel(%arg0: i32, %arg1: memref<8x32xf32, #tpu.memory_space<vmem>>, %arg2: memref<32x128xf32, #tpu.memory_space<vmem>>, %arg3: memref<1x128xf32, #tpu.memory_space<vmem>>, %arg4: memref<8x128xf32, #tpu.memory_space<vmem>>) attributes {dimension_semantics = [#tpu.dimension_semantics<parallel>], iteration_bounds = array<i64: 1>, scalar_prefetch = 0 : i64, scratch_operands = 0 : i64, tpu.core_type = #tpu.core_type<tc>, window_params = [{transform_indices = @transform_0, window_bounds = array<i64: 8, 32>}, {pipeline_mode = #tpu.pipeline_mode<synchronous>, transform_indices = @transform_1, window_bounds = array<i64: 32, 128>}, {pipeline_mode = #tpu.pipeline_mode<synchronous>, transform_indices = @transform_2, window_bounds = array<i64: 1, 128>}, {transform_indices = @transform_3, window_bounds = array<i64: 8, 128>}]} {
    %c0 = arith.constant 0 : index
    %c0_0 = arith.constant 0 : index
    %0 = vector.load %arg1[%c0, %c0_0] : memref<8x32xf32, #tpu.memory_space<vmem>>, vector<8x32xf32>
    %c0_1 = arith.constant 0 : index
    %c0_2 = arith.constant 0 : index
    %1 = vector.load %arg2[%c0_1, %c0_2] : memref<32x128xf32, #tpu.memory_space<vmem>>, vector<32x128xf32>
    %cst = arith.constant dense<0.000000e+00> : vector<8x128xf32>
    %2 = tpu.matmul %0, %1, %cst {dimension_numbers = #tpu.dot_dimension_numbers<[1], [0], [0], [1], [0, 0, 1, 1], [], []>} : vector<8x32xf32>, vector<32x128xf32>, vector<8x128xf32> -> vector<8x128xf32>
    %c0_3 = arith.constant 0 : index
    %c0_4 = arith.constant 0 : index
    %3 = vector.load %arg3[%c0_3, %c0_4] : memref<1x128xf32, #tpu.memory_space<vmem>>, vector<1x128xf32>
    %4 = vector.broadcast %3 : vector<1x128xf32> to vector<8x128xf32>
    %5 = arith.addf %2, %4 : vector<8x128xf32>
    %6 = math.tanh %5 : vector<8x128xf32>
    %c0_5 = arith.constant 0 : index
    %c0_6 = arith.constant 0 : index
    %7 = vector.load %arg4[%c0_5, %c0_6] : memref<8x128xf32, #tpu.memory_space<vmem>>, vector<8x128xf32>
    tpu.vector_store %arg4[%c0_5, %c0_6], %6 {strides = array<i32>} : memref<8x128xf32, #tpu.memory_space<vmem>>, vector<8x128xf32>,
    return
  }
  func.func @transform_0(%arg0: i32) -> (i32, i32) {
    %c0_i32 = arith.constant 0 : i32
    %c0_i32_0 = arith.constant 0 : i32
    return %arg0, %c0_i32 : i32, i32
  }
  func.func @transform_1(%arg0: i32) -> (i32, i32) {
    %c0_i32 = arith.constant 0 : i32
    %c0_i32_0 = arith.constant 0 : i32
    %c0_i32_1 = arith.constant 0 : i32
    return %c0_i32, %c0_i32_0 : i32, i32
  }
  func.func @transform_2(%arg0: i32) -> (i32, i32) {
    %c0_i32 = arith.constant 0 : i32
    %c0_i32_0 = arith.constant 0 : i32
    %c0_i32_1 = arith.constant 0 : i32
    return %c0_i32, %c0_i32_0 : i32, i32
  }
  func.func @transform_3(%arg0: i32) -> (i32, i32) {
    %c0_i32 = arith.constant 0 : i32
    %c0_i32_0 = arith.constant 0 : i32
    return %arg0, %c0_i32 : i32, i32
  }
}

</mosaic_0001>

<llo_original>
// kernel: tpu_custom_call.1
$region0: #{tpu_custom_call.1}
  #allocation0 [shape = 'u32[]', space=smem, size = 0x4, offset = 0x4, fixed_abs, tag = 'smem constant byte address 0x4 - core index']
  #allocation1 [shape = 'u32[144,128]{1,0:T(1,128)}', space=vmem, size = 0x12000, scoped, tag = 'internal scratch']
  %s0 = inlined_call_operand.hbm [shape: f32[8,32], index: 0, kind: input, shape index: {}]
  %s1 = inlined_call_operand.hbm [shape: f32[32,128], index: 1, kind: input, shape index: {}]
  %s2 = inlined_call_operand.vmem [shape: f32[1,128], index: 2, kind: input, shape index: {}]
  %s3 = inlined_call_operand.hbm [shape: f32[8,128], index: 3, kind: output, shape index: {}]
  %s4 = sld [smem:[#allocation0]]
  $region30: #{tpu_custom_call.1} parent=0
    _
  %s6 = ssub.s32 1, %s4
  %s7 = scalar_select 0, %s6, %s4
  $region1: #{tpu_custom_call.1} parent=0
    #allocation2 [shape = 'u8[4096]{0}', space=vmem, size = 0x1000, scoped, tag = 'input window, operand 0, single buffered']
    #allocation3 [shape = 's32[1]{0}', space=sflag, size = 0x4, scoped, tag = 'scoped memory for tpu_custom_call.1']
    #allocation4 [shape = 's32[1]{0}', space=sflag, size = 0x4, scoped, tag = 'scoped memory for tpu_custom_call.1']
    #allocation5 [shape = 'u8[16384]{0}', space=vmem, size = 0x4000, scoped, tag = 'input window, operand 1, single buffered']
    #allocation6 [shape = 's32[1]{0}', space=sflag, size = 0x4, scoped, tag = 'scoped memory for tpu_custom_call.1']
    #allocation7 [shape = 'u8[4096]{0}', space=vmem, size = 0x1000, scoped, tag = 'output window, operand 0, single buffered']
    %8 = vsyncpa [#allocation3], 0
    %9 = vsyncpa [#allocation6], 0
    %10 = vsyncpa [#allocation4], 0
    // Predicated region
    $region2: #{tpu_custom_call.1} parent=1 // pred_check
      _
    $region3: #{tpu_custom_call.1} parent=1 // pred_check_branch
      %12 = sbr.rel (0) target = $region5
    $region4: #{tpu_custom_call.1} parent=1 // pred_region
      %s14 = ssub.s32 128, 128
      %15 = vsyncadd [#allocation3], %s14
      %s17 = sshll.u32 [#allocation2], 4
      %s18 = int_to_ptr.vmem [resolvable:$true] %s17
      %20 = dma.hbm_to_vmem [thread:$0]  %s0, 128, %s18, [#allocation3]
    $region5: #{tpu_custom_call.1} parent=1 // pred_fallthru
      _
    // Predicated region
    $region6: #{tpu_custom_call.1} parent=1 // pred_check
      _
    $region7: #{tpu_custom_call.1} parent=1 // pred_check_branch
      %22 = sbr.rel (0) target = $region9
    $region8: #{tpu_custom_call.1} parent=1 // pred_region
      %s24 = ssub.s32 512, 512
      %25 = vsyncadd [#allocation6], %s24
      %s26 = sshll.u32 [#allocation5], 4
      %s27 = int_to_ptr.vmem [resolvable:$true] %s26
      %32 = dma.hbm_to_vmem [thread:$0]  %s1, 512, %s27, [#allocation6], 128, 128, 8
    $region9: #{tpu_custom_call.1} parent=1 // pred_fallthru
      _
    // Predicated region
    $region10: #{tpu_custom_call.1} parent=1 // pred_check
      _
    $region11: #{tpu_custom_call.1} parent=1 // pred_check_branch
      %34 = sbr.rel (0) target = $region13
    $region12: #{tpu_custom_call.1} parent=1 // pred_region
      _
    $region13: #{tpu_custom_call.1} parent=1 // pred_fallthru
      _
    // Predicated region
    $region14: #{tpu_custom_call.1} parent=1 // pred_check
      _
    $region15: #{tpu_custom_call.1} parent=1 // pred_check_branch
      %36 = sbr.rel (0) target = $region17
    $region16: #{tpu_custom_call.1} parent=1 // pred_region
      %37 = dma.done [#allocation3], 128
    $region17: #{tpu_custom_call.1} parent=1 // pred_fallthru
      _
    // Predicated region
    $region18: #{tpu_custom_call.1} parent=1 // pred_check
      _
    $region19: #{tpu_custom_call.1} parent=1 // pred_check_branch
      %39 = sbr.rel (0) target = $region21
    $region20: #{tpu_custom_call.1} parent=1 // pred_region
      %40 = dma.done [#allocation6], 512
    $region21: #{tpu_custom_call.1} parent=1 // pred_fallthru
      _
    %v41 = vld [vmem:[#allocation2] sm:$0xff]
    %v42 = vld [vmem:[#allocation5] sm:$0xff]
    %v43 = vld [vmem:[#allocation5 + $0x8] sm:$0xff]
    %v44 = vld [vmem:[#allocation5 + $0x10] sm:$0xff]
    %v45 = vld [vmem:[#allocation5 + $0x18] sm:$0xff]
    %v46 = vld [vmem:[%s2] sm:$0x1]
    %v48 = vlaneseq
    %v49 = vshrl.u32 %v48, 7
    %v50 = vsub.s32 0, %v49
    %v51 = vrot.slane %v46, %v50
    %vm53 = vcmask 261120
    %v55 = vsel %vm53, %v41, 0
    %57 = vmatprep.subr.mxu0 0.0
    %58 = vmatpush1.msra.mxu0 0.0
    %59 = vmatprep.subr.mxu0 0.0
    %60 = vmatpush1.msra.mxu0 0.0
    %61 = vmatprep.subr.mxu0 0.0
    %62 = vmatpush1.msra.mxu0 0.0
    %63 = vmatprep.subr.mxu0 0.0
    %64 = vmatpush1.msra.mxu0 0.0
    %65 = vmatprep.subr.mxu0 0.0
    %66 = vmatpush1.msra.mxu0 0.0
    %67 = vmatprep.subr.mxu0 0.0
    %68 = vmatpush1.msra.mxu0 0.0
    %69 = vmatprep.subr.mxu0 0.0
    %70 = vmatpush1.msra.mxu0 0.0
    %71 = vmatprep.subr.mxu0 0.0
    %72 = vmatpush1.msra.mxu0 0.0
    %73 = vmatprep.subr.mxu0 0.0
    %74 = vmatpush1.msra.mxu0 0.0
    %75 = vmatprep.subr.mxu0 0.0
    %76 = vmatpush1.msra.mxu0 0.0
    %77 = vmatprep.subr.mxu0 0.0
    %78 = vmatpush1.msra.mxu0 0.0
    %79 = vmatprep.subr.mxu0 0.0
    %80 = vmatpush1.msra.mxu0 0.0
    %81 = vmatprep.subr.mxu0 0.0
    %82 = vmatpush1.msra.mxu0 %v45
    %83 = vmatprep.subr.mxu0 0.0
    %84 = vmatpush1.msra.mxu0 %v44
    %85 = vmatprep.subr.mxu0 0.0
    %86 = vmatpush1.msra.mxu0 %v43
    %87 = vmatprep.subr.mxu0 0.0
    %88 = vmatpush1.msra.mxu0 %v42
    %89 = vmatprep.subr.mxu0 0.0
    %90 = vmatpush2.msra.mxu0 0.0
    %91 = vmatprep.subr.mxu0 0.0
    %92 = vmatpush2.msra.mxu0 0.0
    %93 = vmatprep.subr.mxu0 0.0
    %94 = vmatpush2.msra.mxu0 0.0
    %95 = vmatprep.subr.mxu0 0.0
    %96 = vmatpush2.msra.mxu0 0.0
    %97 = vmatprep.subr.mxu0 0.0
    %98 = vmatpush2.msra.mxu0 0.0
    %99 = vmatprep.subr.mxu0 0.0
    %100 = vmatpush2.msra.mxu0 0.0
    %101 = vmatprep.subr.mxu0 0.0
    %102 = vmatpush2.msra.mxu0 0.0
    %103 = vmatprep.subr.mxu0 0.0
    %104 = vmatpush2.msra.mxu0 0.0
    %105 = vmatprep.subr.mxu0 0.0
    %106 = vmatpush2.msra.mxu0 0.0
    %107 = vmatprep.subr.mxu0 0.0
    %108 = vmatpush2.msra.mxu0 0.0
    %109 = vmatprep.subr.mxu0 0.0
    %110 = vmatpush2.msra.mxu0 0.0
    %111 = vmatprep.subr.mxu0 0.0
    %112 = vmatpush2.msra.mxu0 0.0
    %113 = vmatprep.subr.mxu0 0.0
    %114 = vmatpush2.msra.mxu0 0.0
    %115 = vmatprep.subr.mxu0 0.0
    %116 = vmatpush2.msra.mxu0 0.0
    %117 = vmatprep.subr.mxu0 0.0
    %118 = vmatpush2.msra.mxu0 0.0
    %119 = vmatprep.subr.mxu0 0.0
    %120 = vmatpush2.msra.mxu0 0.0
    %121 = vmatprep.mubr.f32.mxu0 0.0
    %122 = vmatmul.mubr.f32.gmra.mxu0 %v55
    %v123 = vpop.f32.mrf.mxu0
    %v124 = vadd.f32 %v51, %v123
    %v125 = vpop.f32.mrf.mxu0
    %126 = vdwg.mxu0
    %v127 = vtanh.pop %v124
    %128 = vst [vmem:[#allocation7] sm:$0xff] %v127
    // Predicated region
    $region22: #{tpu_custom_call.1} parent=1 // pred_check
      _
    $region23: #{tpu_custom_call.1} parent=1 // pred_check_branch
      %130 = sbr.rel (0) target = $region25
    $region24: #{tpu_custom_call.1} parent=1 // pred_region
      %s132 = ssub.s32 128, 128
      %133 = vsyncadd [#allocation4], %s132
      %s135 = sshll.u32 [#allocation7], 4
      %s136 = int_to_ptr.vmem [resolvable:$true] %s135
      %138 = dma.vmem_to_hbm [thread:$0]  %s136, 128, %s3, [#allocation4]
    $region25: #{tpu_custom_call.1} parent=1 // pred_fallthru
      _
    // Predicated region
    $region26: #{tpu_custom_call.1} parent=1 // pred_check
      _
    $region27: #{tpu_custom_call.1} parent=1 // pred_check_branch
      %140 = sbr.rel (0) target = $region29
    $region28: #{tpu_custom_call.1} parent=1 // pred_region
      %141 = dma.done [#allocation4], 128
    $region29: #{tpu_custom_call.1} parent=1 // pred_fallthru
      _
    %142 = vsyncpa [#allocation3], 1
    %143 = vsyncpa [#allocation6], 1
    %144 = vsyncpa [#allocation4], 1

</llo_original>
